<compile_context>
chip_gen: v5e
topology: v5e:2x2
jax: 0.10.0
libtpu: 0.0.40
codegen_flags: <defaults>
</compile_context>

<pallas_src>
import functools

import jax
import jax.numpy as jnp
from jax.experimental import pallas as pl
from jax.experimental.pallas import tpu as pltpu


# ---------------------------------------------------------------------------
# One-time probe: verify pltpu.roll's rotation direction (np.roll convention
# expected).  Runs under interpret mode (no device compile); falls back to a
# tiny on-device probe if the interpreter rejects the TPU primitive.
# ---------------------------------------------------------------------------
_ROLL_SIGN = None


def _roll_sign():
    """Returns +1 if pltpu.roll(x, s) == np.roll(x, s), else -1."""
    global _ROLL_SIGN
    if _ROLL_SIGN is not None:
        return _ROLL_SIGN

    v = jnp.broadcast_to(jnp.arange(256, dtype=jnp.float32), (8, 256))

    def probe(x_ref, o_ref):
        o_ref[...] = pltpu.roll(x_ref[...], shift=1, axis=1)

    def run(interpret):
        return pl.pallas_call(
            probe,
            out_shape=jax.ShapeDtypeStruct((8, 256), jnp.float32),
            interpret=interpret,
        )(v)

    try:
        r = run(True)          # CPU emulation: no device compile / launch
    except Exception:          # pragma: no cover - interpreter lacks the primitive
        r = run(False)         # one tiny on-device probe (first call only)
    _ROLL_SIGN = 1 if int(r[0, 0]) == 255 else -1
    return _ROLL_SIGN


# ---------------------------------------------------------------------------
# In-kernel helpers
# ---------------------------------------------------------------------------
def _make_roller(x, roll_sign):
    """Memoised lane roll with np.roll semantics (positive shift -> higher index)."""
    lanes = x.shape[-1]
    cache = {0: x}

    def get(shift):
        amt = (roll_sign * shift) % lanes
        if amt not in cache:
            cache[amt] = pltpu.roll(x, shift=amt, axis=1)
        return cache[amt]

    return get


def _reflect(t, size):
    if t < 0:
        return -t
    if t >= size:
        return 2 * (size - 1) - t
    return t


def _tap_1d(get_roll, s, masks, size, stride):
    """Value at virtual coordinate c becomes the value at reflect(c + s).

    The virtual axis has extent `size`; one coordinate step == `stride` lanes.
    Interior positions are a single lane roll; the |s| boundary positions are
    fixed up with masked selects using the precomputed `masks[c0]` booleans
    (PyTorch ReflectionPad2d semantics).
    """
    if s == 0:
        return get_roll(0)
    out = get_roll(-s * stride)  # interior: value from coordinate (c + s)
    boundary = range(size - s, size) if s > 0 else range(0, -s)
    for c0 in boundary:
        delta = _reflect(c0 + s, size) - c0
        out = jnp.where(masks[c0], get_roll(-delta * stride), out)
    return out


def _stage(x, dw_cols, pw_mat, *, d, n, c, h, w, wmasks, hmasks, gamma3, beta3,
           roll_sign):
    """One fused SeparableConv2D (3x3 depthwise dil=d, reflect-pad d, 1x1 pointwise)
    -> BatchNorm2d (batch stats) -> LeakyReLU(0.2), on the flat (N*C, H*W) layout.

    Depthwise/pointwise biases are omitted: per-channel additive constants before a
    batch-stat BatchNorm are exactly removed by the mean subtraction."""
    R, L = x.shape

    # --- depthwise 3x3 conv, dilation d, reflection pad d: 9 shifted MACs (VPU + XLU rolls) ---
    get_x = _make_roller(x, roll_sign)
    acc = None
    for j, sw in enumerate((-d, 0, d)):            # kernel column -> W shift
        xj = _tap_1d(get_x, sw, wmasks, w, 1)
        get_j = _make_roller(xj, roll_sign)
        for i, sh in enumerate((-d, 0, d)):        # kernel row    -> H shift
            tap = _tap_1d(get_j, sh, hmasks, h, w)
            k = i * 3 + j
            term = tap * dw_cols[:, k:k + 1]
            acc = term if acc is None else acc + term

    # --- pointwise 1x1 conv: block-diagonal (R,R) @ (R,L) matmul on the (otherwise idle) MXU ---
    y = jnp.dot(pw_mat, acc, preferred_element_type=jnp.float32)

    # --- BatchNorm2d (training-mode semantics: per-call batch stats, biased var), one pass ---
    y3 = y.reshape(n, c, L)
    cnt = n * L
    s1 = jnp.sum(jnp.sum(y3, axis=2, keepdims=True), axis=0, keepdims=True)        # (1, C, 1)
    s2 = jnp.sum(jnp.sum(y3 * y3, axis=2, keepdims=True), axis=0, keepdims=True)   # (1, C, 1)
    mean = s1 * (1.0 / cnt)
    var = s2 * (1.0 / cnt) - mean * mean
    scale = gamma3 * jax.lax.rsqrt(var + 1e-5)
    shift = beta3 - mean * scale
    y3 = y3 * scale + shift

    # --- LeakyReLU(0.2) ---
    y3 = jnp.where(y3 > 0.0, y3, 0.2 * y3)
    return y3.reshape(R, L)


def _make_kernel(n, c, h, w, roll_sign):
    R, L = n * c, h * w

    def kernel(x_ref, dw1_ref, m1_ref, dw2_ref, m2_ref, dw3_ref, m3_ref, bn_ref,
               out_ref):
        x = x_ref[...].astype(jnp.float32)
        bn = bn_ref[...]
        gamma3 = bn[:, 0:1].reshape(1, c, 1)
        beta3 = bn[:, 1:2].reshape(1, c, 1)

        # Boundary masks, computed once and shared by all three stages.
        lane = jax.lax.broadcasted_iota(jnp.int32, (R, L), 1)
        wcoord = lane % w
        hcoord = lane // w
        wmasks = {c0: wcoord == c0 for c0 in (0, 1, w - 2, w - 1)}
        hmasks = {c0: hcoord == c0 for c0 in (0, 1, h - 2, h - 1)}

        run = functools.partial(_stage, n=n, c=c, h=h, w=w,
                                wmasks=wmasks, hmasks=hmasks,
                                gamma3=gamma3, beta3=beta3,
                                roll_sign=roll_sign)

        X = run(x, dw1_ref[...], m1_ref[...], d=1)    # X  = LReLU(BN(SepConv1(pad1(x))))
        B1 = run(X, dw2_ref[...], m2_ref[...], d=1)   # branch 1 from X
        B2 = run(X, dw3_ref[...], m3_ref[...], d=2)   # branch 2 from X, dilation 2, pad 2
        out_ref[...] = (x + B1 + B2).astype(out_ref.dtype)

    return kernel


# ---------------------------------------------------------------------------
# One-time parameter packing (do this when weights are set, NOT per call)
# ---------------------------------------------------------------------------
def _block_diag_pointwise(pw, n):
    """Block-diagonal (n*C, n*C) matrix M with per-image block pw^T, so that
    y = M @ acc applies the 1x1 pointwise conv on the flat (N*C, H*W) layout."""
    blk = pw.T.astype(jnp.float32)                 # (Cout, Cin)
    return jnp.kron(jnp.eye(n, dtype=jnp.float32), blk)


def prepare_params(p1, p2, p3, gamma, beta, n):
    """Pack PyTorch-style parameters into the kernel's layouts.

    Depthwise/pointwise biases are dropped here: under per-call batch-stat
    BatchNorm they are mathematically no-ops (exactly cancelled by the mean
    subtraction).  If eval-mode / running-stat BN is ever needed, the biases
    and the BN path must be reinstated."""
    def one(p):
        dw, dwb, pw, pwb = p
        del dwb, pwb                                # absorbed by batch-stat BN
        dw_rows = jnp.tile(dw.T, (n, 1)).astype(jnp.float32)   # (n*C, 9): row n*C+ch -> dw[:, ch]
        pw_mat = _block_diag_pointwise(pw, n)                  # (n*C, n*C)
        return dw_rows, pw_mat

    dw1, m1 = one(p1)
    dw2, m2 = one(p2)
    dw3, m3 = one(p3)
    bn = jnp.stack([gamma, beta], axis=1).astype(jnp.float32)  # (C, 2)
    packed = (dw1, m1, dw2, m2, dw3, m3, bn)
    return jax.tree_util.tree_map(jax.block_until_ready, packed)


# ---------------------------------------------------------------------------
# Wrapper (NCHW in / NCHW out)
# ---------------------------------------------------------------------------
@functools.partial(jax.jit, static_argnums=(2,))
def _forward_impl(x_nchw, packed, roll_sign):
    dw1, m1, dw2, m2, dw3, m3, bn = packed
    n, c, h, w = x_nchw.shape
    R, L = n * c, h * w
    x_flat = x_nchw.reshape(R, L)                  # pure reshape: free, no transpose

    out_flat = pl.pallas_call(
        _make_kernel(n, c, h, w, roll_sign),
        out_shape=jax.ShapeDtypeStruct((R, L), x_nchw.dtype),
        in_specs=[pl.BlockSpec(memory_space=pltpu.MemorySpace.VMEM)] * 8,
        out_specs=pl.BlockSpec(memory_space=pltpu.MemorySpace.VMEM),
    )(x_flat, dw1, m1, dw2, m2, dw3, m3, bn)
    return out_flat.reshape(n, c, h, w)


def novel_residual_block_forward(x_nchw, packed_params):
    """Forward pass matching PyTorch `novel_residual_block.forward` (NCHW in/out).

    `packed_params` must come from `prepare_params(...)` (one-time packing)."""
    return _forward_impl(x_nchw, packed_params, _roll_sign())


# ---------------------------------------------------------------------------
# Pure-JAX reference (independent path: NHWC + jnp.pad reflect, biases kept),
# for verification of the kernel (including the bias-absorption claim).
# ---------------------------------------------------------------------------
def _ref_stage(x_nhwc, dw, dwb, pw, pwb, gamma, beta, d):
    N, H, W, C = x_nhwc.shape
    xpad = jnp.pad(x_nhwc, ((0, 0), (d, d), (d, d), (0, 0)), mode="reflect")
    acc = jnp.zeros((N, H, W, C), jnp.float32)
    for i in range(3):
        for j in range(3):
            acc = acc + xpad[:, i * d:i * d + H, j * d:j * d + W, :] * dw[i * 3 + j]
    acc = acc + dwb
    y = acc.reshape(N * H * W, C) @ pw + pwb
    mean = y.mean(0, keepdims=True)
    var = ((y - mean) ** 2).mean(0, keepdims=True)
    y = (y - mean) * jax.lax.rsqrt(var + 1e-5) * gamma + beta
    y = jnp.where(y > 0, y, 0.2 * y)
    return y.reshape(N, H, W, C)


def _reference_forward(x_nchw, p1, p2, p3, gamma, beta):
    x = jnp.transpose(x_nchw, (0, 2, 3, 1))
    X = _ref_stage(x, *p1, gamma, beta, 1)
    B1 = _ref_stage(X, *p2, gamma, beta, 1)
    B2 = _ref_stage(X, *p3, gamma, beta, 2)
    return jnp.transpose(x + B1 + B2, (0, 3, 1, 2))


if __name__ == "__main__":
    key = jax.random.PRNGKey(0)
    N, C, H, W = 2, 8, 16, 16  # batch=2, filters=8, spatial=16
    kx, k1, k2, k3, kg, kb = jax.random.split(key, 6)
    x = jax.random.normal(kx, (N, C, H, W), jnp.float32)

    def conv_params(k, c):
        ka, kb_, kc, kd = jax.random.split(k, 4)
        dw = jax.random.normal(ka, (9, c), jnp.float32) * 0.2           # 3x3 depthwise taps
        dwb = jax.random.normal(kb_, (c,), jnp.float32) * 0.1           # depthwise bias
        pw = jax.random.normal(kc, (c, c), jnp.float32) / jnp.sqrt(c)   # 1x1 pointwise (Cin, Cout)
        pwb = jax.random.normal(kd, (c,), jnp.float32) * 0.1            # pointwise bias
        return dw, dwb, pw, pwb

    p1, p2, p3 = conv_params(k1, C), conv_params(k2, C), conv_params(k3, C)
    # Single BatchNorm2d module reused for all three stages; non-trivial affine to exercise it.
    gamma = 1.0 + 0.1 * jax.random.normal(kg, (C,), jnp.float32)
    beta = 0.1 * jax.random.normal(kb, (C,), jnp.float32)

    packed = prepare_params(p1, p2, p3, gamma, beta, N)   # one-time packing (outside hot path)
    out = jax.block_until_ready(novel_residual_block_forward(x, packed))
    ref = _reference_forward(x, p1, p2, p3, gamma, beta)

    assert out.shape == (N, C, H, W)
    err = float(jnp.max(jnp.abs(out - ref)))
    assert err < 2e-3, f"max|out-ref| = {err}"
    print("KERNEL_OK")
</pallas_src>

<mosaic_0001>
module attributes {stable_mosaic.version = 11 : i64} {
  func.func @probe(%arg0: memref<8x256xf32, #tpu.memory_space<vmem>>, %arg1: memref<8x256xf32, #tpu.memory_space<vmem>>) attributes {dimension_semantics = [], scalar_prefetch = 0 : i64, scratch_operands = 0 : i64, tpu.core_type = #tpu.core_type<tc>} {
    %c0 = arith.constant 0 : index
    %c0_0 = arith.constant 0 : index
    %0 = vector.load %arg0[%c0, %c0_0] : memref<8x256xf32, #tpu.memory_space<vmem>>, vector<8x256xf32>
    %c1_i32 = arith.constant 1 : i32
    %1 = tpu.dynamic_rotate %0 by %c1_i32 dim 1 : vector<8x256xf32>, i32 -> vector<8x256xf32>
    %c0_1 = arith.constant 0 : index
    %c0_2 = arith.constant 0 : index
    %2 = vector.load %arg1[%c0_1, %c0_2] : memref<8x256xf32, #tpu.memory_space<vmem>>, vector<8x256xf32>
    tpu.vector_store %arg1[%c0_1, %c0_2], %1 {strides = array<i32>} : memref<8x256xf32, #tpu.memory_space<vmem>>, vector<8x256xf32>,
    return
  }
}

</mosaic_0001>

<llo_original>
// kernel: tpu_custom_call.1
$region0: #{tpu_custom_call.1}
  #allocation0 [shape = 'u32[]', space=smem, size = 0x4, offset = 0x4, fixed_abs, tag = 'smem constant byte address 0x4 - core index']
  #allocation1 [shape = 'u32[72,128]{1,0:T(1,128)}', space=vmem, size = 0x9000, scoped, tag = 'internal scratch']
  %s0 = inlined_call_operand.hbm [shape: f32[8,256], index: 0, kind: input, shape index: {}]
  %s1 = inlined_call_operand.hbm [shape: f32[8,256], index: 1, kind: output, shape index: {}]
  %s2 = sld [smem:[#allocation0]]
  $region18: #{tpu_custom_call.1} parent=0
    _
  %s4 = ssub.s32 1, %s2
  %s5 = scalar_select 0, %s4, %s2
  $region1: #{tpu_custom_call.1} parent=0
    #allocation2 [shape = 'u8[8192]{0}', space=vmem, size = 0x2000, scoped, tag = 'input window, operand 0, single buffered']
    #allocation3 [shape = 's32[1]{0}', space=sflag, size = 0x4, scoped, tag = 'scoped memory for tpu_custom_call.1']
    #allocation4 [shape = 's32[1]{0}', space=sflag, size = 0x4, scoped, tag = 'scoped memory for tpu_custom_call.1']
    #allocation5 [shape = 'u8[8192]{0}', space=vmem, size = 0x2000, scoped, tag = 'output window, operand 0, single buffered']
    %6 = vsyncpa [#allocation3], 0
    %7 = vsyncpa [#allocation4], 0
    // Predicated region
    $region2: #{tpu_custom_call.1} parent=1 // pred_check
      _
    $region3: #{tpu_custom_call.1} parent=1 // pred_check_branch
      %9 = sbr.rel (0) target = $region5
    $region4: #{tpu_custom_call.1} parent=1 // pred_region
      %11 = vsyncadd [#allocation3], 0
      %s13 = sshll.u32 %s0, 4
      %s14 = int_to_ptr.hbm [resolvable:$true] %s13
      %s15 = sshll.u32 [#allocation2], 4
      %s16 = int_to_ptr.vmem [resolvable:$true] %s15
      %18 = dma.hbm_to_vmem [thread:$0]  %s14, 256, %s16, [#allocation3]
    $region5: #{tpu_custom_call.1} parent=1 // pred_fallthru
      _
    // Predicated region
    $region6: #{tpu_custom_call.1} parent=1 // pred_check
      _
    $region7: #{tpu_custom_call.1} parent=1 // pred_check_branch
      %20 = sbr.rel (0) target = $region9
    $region8: #{tpu_custom_call.1} parent=1 // pred_region
      %22 = dma.done [#allocation3], 256
    $region9: #{tpu_custom_call.1} parent=1 // pred_fallthru
      _
    %v23 = vld [vmem:[#allocation2] sm:$0xff]
    %v24 = vld [vmem:[#allocation2 + $0x8] sm:$0xff]
    %25 = vrot.lane.b32.xlu0 %v23, 1
    %v26 = vpop.permute.xlu0 %25
    %27 = vrot.lane.b32.xlu0 %v24, 1
    %v28 = vpop.permute.xlu0 %27
    %v29 = vlaneseq
    %v30 = vand.u32 %v29, 127
    %vm31 = vcmp.lt.s32.totalorder %v30, 1
    %v32 = vsel %vm31, %v26, %v28
    %v33 = vsel %vm31, %v28, %v26
    %34 = vst [vmem:[#allocation5] sm:$0xff] %v33
    %35 = vst [vmem:[#allocation5 + $0x8] sm:$0xff] %v32
    // Predicated region
    $region10: #{tpu_custom_call.1} parent=1 // pred_check
      _
    $region11: #{tpu_custom_call.1} parent=1 // pred_check_branch
      %37 = sbr.rel (0) target = $region13
    $region12: #{tpu_custom_call.1} parent=1 // pred_region
      %39 = vsyncadd [#allocation4], 0
      %s41 = sshll.u32 [#allocation5], 4
      %s42 = int_to_ptr.vmem [resolvable:$true] %s41
      %s43 = sshll.u32 %s1, 4
      %s44 = int_to_ptr.hbm [resolvable:$true] %s43
      %46 = dma.vmem_to_hbm [thread:$0]  %s42, 256, %s44, [#allocation4]
    $region13: #{tpu_custom_call.1} parent=1 // pred_fallthru
      _
    // Predicated region
    $region14: #{tpu_custom_call.1} parent=1 // pred_check
      _
    $region15: #{tpu_custom_call.1} parent=1 // pred_check_branch
      %48 = sbr.rel (0) target = $region17
    $region16: #{tpu_custom_call.1} parent=1 // pred_region
      %50 = dma.done [#allocation4], 256
    $region17: #{tpu_custom_call.1} parent=1 // pred_fallthru
      _
    %51 = vsyncpa [#allocation3], 1
    %52 = vsyncpa [#allocation4], 1

</llo_original>
